<compile_context>
chip_gen: v5e
topology: v5e:2x2
jax: 0.10.0
libtpu: 0.0.40
codegen_flags: <defaults>
</compile_context>

<pallas_src>
import functools

import jax
import jax.numpy as jnp
from jax.experimental import pallas as pl
from jax.experimental.pallas import tpu as pltpu

D_IN, H1, H2, D_OUT = 17, 15, 7, 1


def _round_up(n, m):
    return ((n + m - 1) // m) * m


def _cdiv(a, b):
    return (a + b - 1) // b


# Row offsets inside the packed parameter slab.  Every segment starts on an
# 8-row (sublane) boundary and at lane 0 so the in-kernel static slices stay
# aligned and cheap.  Weights are stored TRANSPOSED (out_features on sublanes)
# and biases as column vectors, matching the batch-on-lanes compute layout.
_R_W1T = 0                               # (15, 17)  == W1^T
_R_B1 = _round_up(_R_W1T + H1, 8)        # 16: (15, 1) column
_R_W2T = _round_up(_R_B1 + H1, 8)        # 32: (7, 15) == W2^T
_R_B2 = _round_up(_R_W2T + H2, 8)        # 40: (7, 1) column
_R_W3 = _round_up(_R_B2 + H2, 8)         # 48: (7, 1) column (w3 as a column)
_R_B3 = _round_up(_R_W3 + H2, 8)         # 56: (1, 1)
SLAB_ROWS = _round_up(_R_B3 + 1, 8)      # 64
SLAB_COLS = 128                          # 64x128 f32 = 32 KiB, one DMA


def pack_params(params):
    """Packs (w1, b1, w2, b2, w3, b3) into a single (64, 128) f32 slab.
    Call once per parameter set (outside the per-forward jitted path)."""
    w1, b1, w2, b2, w3, b3 = params
    slab = jnp.zeros((SLAB_ROWS, SLAB_COLS), jnp.float32)
    slab = slab.at[_R_W1T:_R_W1T + H1, :D_IN].set(jnp.asarray(w1, jnp.float32).T)
    slab = slab.at[_R_B1:_R_B1 + H1, 0].set(jnp.asarray(b1, jnp.float32).reshape(H1))
    slab = slab.at[_R_W2T:_R_W2T + H2, :H1].set(jnp.asarray(w2, jnp.float32).T)
    slab = slab.at[_R_B2:_R_B2 + H2, 0].set(jnp.asarray(b2, jnp.float32).reshape(H2))
    slab = slab.at[_R_W3:_R_W3 + H2, 0].set(jnp.asarray(w3, jnp.float32).reshape(H2))
    slab = slab.at[_R_B3, 0].set(jnp.asarray(b3, jnp.float32).reshape(()))
    return slab


def _mlp_kernel(x_ref, p_ref, o_ref):
    """Fused MLP over one batch tile; batch on lanes, features on sublanes."""
    # Compute in f32 regardless of input dtype (v5e VPU/EUP have no bf16).
    x = x_ref[...].astype(jnp.float32)                    # (17, tile)

    w1t = p_ref[_R_W1T:_R_W1T + H1, 0:D_IN]               # (15, 17)
    b1 = p_ref[_R_B1:_R_B1 + H1, 0:1]                     # (15, 1)
    w2t = p_ref[_R_W2T:_R_W2T + H2, 0:H1]                 # (7, 15)
    b2 = p_ref[_R_B2:_R_B2 + H2, 0:1]                     # (7, 1)
    w3c = p_ref[_R_W3:_R_W3 + H2, 0:1]                    # (7, 1)
    b3 = p_ref[_R_B3:_R_B3 + 1, 0:1]                      # (1, 1)

    # Layers 1 and 2 on the MXU with lane-dense (features x batch) results.
    h1 = jnp.tanh(jnp.dot(w1t, x, preferred_element_type=jnp.float32) + b1)   # (15, tile)
    h2 = jnp.tanh(jnp.dot(w2t, h1, preferred_element_type=jnp.float32) + b2)  # (7, tile)
    # Final Linear(7 -> 1): VPU multiply + sublane reduce (no MXU, no
    # cross-lane reduce), output is a lane-dense (1, tile) row.
    out = jnp.sum(h2 * w3c, axis=0, keepdims=True) + b3                        # (1, tile)
    o_ref[...] = out.astype(o_ref.dtype)


def _num_tensorcores():
    """Best-effort detection of TensorCores per chip (v7x has 2)."""
    try:
        kind = jax.devices()[0].device_kind.lower()
    except Exception:  # pragma: no cover
        return 1
    return 2 if "v7" in kind else 1


def _pick_tile(batch):
    """Batch-tile columns: a multiple of 128 lanes.  Single-TC chips get one
    big tile (few grid steps, amortizes per-step overhead); multi-TC chips
    (v7x) get >= num_cores grid steps so the 'parallel' axis can be sharded."""
    b128 = max(_round_up(batch, 128), 128)
    cap = 16384  # (24,16384)+(8,16384) f32 double-buffered ~= 4 MiB: fits all gens.
    n_cores = _num_tensorcores()
    if n_cores > 1 and batch >= 512:
        per_core = _round_up(_cdiv(b128, n_cores), 128)
        return min(per_core, cap)
    return min(b128, cap)


@functools.partial(jax.jit, static_argnames=("tile",))
def deep_neural_network(x, slab, *, tile=None):
    """Full forward pass of DeepNeuralNetwork in a single fused Pallas kernel.
    `x` is (B, 17); `slab` is the packed parameter slab from pack_params."""
    B, f_in = x.shape
    assert f_in == D_IN, f_in

    # Batch-on-lanes layout: features on sublanes, batch on the 128-lane axis.
    x_t = x.T                                             # (17, B)

    if tile is None:
        tile = _pick_tile(B)
    tile = max(_round_up(tile, 128), 128)
    grid = (_cdiv(B, tile),)                              # ragged last block OK

    flops_per_row = 2 * (D_IN * H1 + H1 * H2 + H2 * D_OUT)   # 734
    cost = pl.CostEstimate(
        flops=flops_per_row * B,
        transcendentals=(H1 + H2) * B,                       # 22 per row
        bytes_accessed=(B * (D_IN + D_OUT) * x.dtype.itemsize
                        + SLAB_ROWS * SLAB_COLS * 4),
    )

    out_t = pl.pallas_call(
        _mlp_kernel,
        out_shape=jax.ShapeDtypeStruct((D_OUT, B), x.dtype),
        grid_spec=pltpu.PrefetchScalarGridSpec(
            num_scalar_prefetch=0,
            grid=grid,
            in_specs=[
                pl.BlockSpec((D_IN, tile), lambda i: (0, i)),            # x^T tile
                pl.BlockSpec((SLAB_ROWS, SLAB_COLS), lambda i: (0, 0)),  # params (constant block)
            ],
            out_specs=pl.BlockSpec((D_OUT, tile), lambda i: (0, i)),     # lane-dense out row
        ),
        compiler_params=pltpu.CompilerParams(
            dimension_semantics=("parallel",),
        ),
        cost_estimate=cost,
    )(x_t, slab)

    # (1, B) -> (B, 1) to match the PyTorch module's output shape.
    return out_t.reshape(B, D_OUT)


def init_params(key):
    """Deterministic init matching PyTorch nn.Linear default:
    U(-1/sqrt(fan_in), 1/sqrt(fan_in)) for both weight and bias.
    Weights are stored as [in_features, out_features]."""
    dims = [(D_IN, H1), (H1, H2), (H2, D_OUT)]
    params = []
    for fan_in, fan_out in dims:
        key, kw, kb = jax.random.split(key, 3)
        bound = 1.0 / jnp.sqrt(fan_in)
        w = jax.random.uniform(kw, (fan_in, fan_out), jnp.float32, -bound, bound)
        b = jax.random.uniform(kb, (1, fan_out), jnp.float32, -bound, bound)
        params += [w, b]
    return tuple(params)


def reference_forward(x, params):
    w1, b1, w2, b2, w3, b3 = params
    h1 = jnp.tanh(x @ w1 + b1)
    h2 = jnp.tanh(h1 @ w2 + b2)
    return h2 @ w3 + b3


if __name__ == "__main__":
    key = jax.random.PRNGKey(0)
    key, kx = jax.random.split(key)
    params = init_params(key)
    slab = pack_params(params)   # packed once, outside the per-call jit path

    # Small demo batch: single grid step, ragged (16 < 128-lane tile) block.
    B = 16
    x = jax.random.normal(kx, (B, D_IN), jnp.float32)
    out = jax.block_until_ready(deep_neural_network(x, slab))
    ref = reference_forward(x, params)
    assert out.shape == (B, D_OUT), out.shape
    assert jnp.allclose(out, ref, atol=1e-4, rtol=1e-4), "mismatch vs reference (B=16)"

    # Multi-step 'parallel' grid with a ragged last block (no padding copy).
    B2 = 300
    x2 = jax.random.normal(jax.random.PRNGKey(1), (B2, D_IN), jnp.float32)
    out2 = jax.block_until_ready(deep_neural_network(x2, slab, tile=128))
    ref2 = reference_forward(x2, params)
    assert out2.shape == (B2, D_OUT), out2.shape
    assert jnp.allclose(out2, ref2, atol=1e-4, rtol=1e-4), "mismatch vs reference (B=300)"

    print("KERNEL_OK")
</pallas_src>

<mosaic_0001>
module attributes {stable_mosaic.version = 11 : i64} {
  func.func @_mlp_kernel(%arg0: i32, %arg1: memref<17x128xf32, #tpu.memory_space<vmem>>, %arg2: memref<64x128xf32, #tpu.memory_space<vmem>>, %arg3: memref<1x128xf32, #tpu.memory_space<vmem>>) attributes {dimension_semantics = [#tpu.dimension_semantics<parallel>], iteration_bounds = array<i64: 1>, scalar_prefetch = 0 : i64, scratch_operands = 0 : i64, tpu.core_type = #tpu.core_type<tc>, window_params = [{transform_indices = @transform_0, window_bounds = array<i64: 17, 128>}, {pipeline_mode = #tpu.pipeline_mode<synchronous>, transform_indices = @transform_1, window_bounds = array<i64: 64, 128>}, {transform_indices = @transform_2, window_bounds = array<i64: 1, 128>}]} {
    %c0 = arith.constant 0 : index
    %c0_0 = arith.constant 0 : index
    %0 = vector.load %arg1[%c0, %c0_0] : memref<17x128xf32, #tpu.memory_space<vmem>>, vector<17x128xf32>
    %c0_1 = arith.constant 0 : index
    %c0_2 = arith.constant 0 : index
    %1 = vector.load %arg2[%c0_1, %c0_2] : memref<64x128xf32, #tpu.memory_space<vmem>>, vector<15x17xf32>
    %c16 = arith.constant 16 : index
    %c0_3 = arith.constant 0 : index
    %2 = vector.load %arg2[%c16, %c0_3] : memref<64x128xf32, #tpu.memory_space<vmem>>, vector<15x1xf32>
    %c32 = arith.constant 32 : index
    %c0_4 = arith.constant 0 : index
    %3 = vector.load %arg2[%c32, %c0_4] : memref<64x128xf32, #tpu.memory_space<vmem>>, vector<7x15xf32>
    %c40 = arith.constant 40 : index
    %c0_5 = arith.constant 0 : index
    %4 = vector.load %arg2[%c40, %c0_5] : memref<64x128xf32, #tpu.memory_space<vmem>>, vector<7x1xf32>
    %c48 = arith.constant 48 : index
    %c0_6 = arith.constant 0 : index
    %5 = vector.load %arg2[%c48, %c0_6] : memref<64x128xf32, #tpu.memory_space<vmem>>, vector<7x1xf32>
    %c56 = arith.constant 56 : index
    %c0_7 = arith.constant 0 : index
    %6 = vector.load %arg2[%c56, %c0_7] : memref<64x128xf32, #tpu.memory_space<vmem>>, vector<1x1xf32>
    %cst = arith.constant dense<0.000000e+00> : vector<15x128xf32>
    %7 = tpu.matmul %1, %0, %cst {dimension_numbers = #tpu.dot_dimension_numbers<[1], [0], [0], [1], [0, 0, 1, 1], [], []>} : vector<15x17xf32>, vector<17x128xf32>, vector<15x128xf32> -> vector<15x128xf32>
    %8 = vector.broadcast %2 : vector<15x1xf32> to vector<15x128xf32>
    %9 = arith.addf %7, %8 : vector<15x128xf32>
    %10 = math.tanh %9 : vector<15x128xf32>
    %cst_8 = arith.constant dense<0.000000e+00> : vector<7x128xf32>
    %11 = tpu.matmul %3, %10, %cst_8 {dimension_numbers = #tpu.dot_dimension_numbers<[1], [0], [0], [1], [0, 0, 1, 1], [], []>} : vector<7x15xf32>, vector<15x128xf32>, vector<7x128xf32> -> vector<7x128xf32>
    %12 = vector.broadcast %4 : vector<7x1xf32> to vector<7x128xf32>
    %13 = arith.addf %11, %12 : vector<7x128xf32>
    %14 = math.tanh %13 : vector<7x128xf32>
    %15 = vector.broadcast %5 : vector<7x1xf32> to vector<7x128xf32>
    %16 = arith.mulf %14, %15 : vector<7x128xf32>
    %cst_9 = arith.constant dense<0.000000e+00> : vector<128xf32>
    %17 = vector.multi_reduction <add>, %16, %cst_9 [0] : vector<7x128xf32> to vector<128xf32>
    %18 = vector.shape_cast %17 : vector<128xf32> to vector<1x128xf32>
    %19 = vector.broadcast %6 : vector<1x1xf32> to vector<1x128xf32>
    %20 = arith.addf %18, %19 : vector<1x128xf32>
    %c0_10 = arith.constant 0 : index
    %c0_11 = arith.constant 0 : index
    %21 = vector.load %arg3[%c0_10, %c0_11] : memref<1x128xf32, #tpu.memory_space<vmem>>, vector<1x128xf32>
    tpu.vector_store %arg3[%c0_10, %c0_11], %20 {strides = array<i32>} : memref<1x128xf32, #tpu.memory_space<vmem>>, vector<1x128xf32>,
    return
  }
  func.func @transform_0(%arg0: i32) -> (i32, i32) {
    %c0_i32 = arith.constant 0 : i32
    %c0_i32_0 = arith.constant 0 : i32
    return %c0_i32, %arg0 : i32, i32
  }
  func.func @transform_1(%arg0: i32) -> (i32, i32) {
    %c0_i32 = arith.constant 0 : i32
    %c0_i32_0 = arith.constant 0 : i32
    %c0_i32_1 = arith.constant 0 : i32
    return %c0_i32, %c0_i32_0 : i32, i32
  }
  func.func @transform_2(%arg0: i32) -> (i32, i32) {
    %c0_i32 = arith.constant 0 : i32
    %c0_i32_0 = arith.constant 0 : i32
    return %c0_i32, %arg0 : i32, i32
  }
}

</mosaic_0001>

<llo_original>
// kernel: deep_neural_network.1
$region0: #{deep_neural_network.1}
  #allocation0 [shape = 'u32[]', space=smem, size = 0x4, offset = 0x4, fixed_abs, tag = 'smem constant byte address 0x4 - core index']
  #allocation1 [shape = 'u32[72,128]{1,0:T(1,128)}', space=vmem, size = 0x9000, scoped, tag = 'internal scratch']
  %s0 = inlined_call_operand.vmem [shape: f32[17,16], index: 0, kind: input, shape index: {}]
  %s1 = inlined_call_operand.hbm [shape: f32[64,128], index: 1, kind: input, shape index: {}]
  %s2 = inlined_call_operand.hbm [shape: f32[1,16], index: 2, kind: output, shape index: {}]
  %s3 = sld [smem:[#allocation0]]
  $region22: #{deep_neural_network.1} parent=0
    _
  %s5 = ssub.s32 1, %s3
  %s6 = scalar_select 0, %s5, %s3
  $region1: #{deep_neural_network.1} parent=0
    #allocation2 [shape = 'u8[32768]{0}', space=vmem, size = 0x8000, scoped, tag = 'input window, operand 1, single buffered']
    #allocation3 [shape = 's32[1]{0}', space=sflag, size = 0x4, scoped, tag = 'scoped memory for deep_neural_network.1']
    #allocation4 [shape = 's32[1]{0}', space=sflag, size = 0x4, scoped, tag = 'scoped memory for deep_neural_network.1']
    #allocation5 [shape = 'u8[512]{0}', space=vmem, size = 0x400, scoped, tag = 'output window, operand 0, single buffered']
    %7 = vsyncpa [#allocation3], 0
    %8 = vsyncpa [#allocation4], 0
    // Predicated region
    $region2: #{deep_neural_network.1} parent=1 // pred_check
      _
    $region3: #{deep_neural_network.1} parent=1 // pred_check_branch
      %10 = sbr.rel (0) target = $region5
    $region4: #{deep_neural_network.1} parent=1 // pred_region
      _
    $region5: #{deep_neural_network.1} parent=1 // pred_fallthru
      _
    // Predicated region
    $region6: #{deep_neural_network.1} parent=1 // pred_check
      _
    $region7: #{deep_neural_network.1} parent=1 // pred_check_branch
      %12 = sbr.rel (0) target = $region9
    $region8: #{deep_neural_network.1} parent=1 // pred_region
      %14 = vsyncadd [#allocation3], 0
      %s15 = sshll.u32 %s1, 4
      %s16 = int_to_ptr.hbm [resolvable:$true] %s15
      %s17 = sshll.u32 [#allocation2], 4
      %s18 = int_to_ptr.vmem [resolvable:$true] %s17
      %23 = dma.hbm_to_vmem [thread:$0]  %s16, 1024, %s18, [#allocation3], 128, 128, 8
    $region9: #{deep_neural_network.1} parent=1 // pred_fallthru
      _
    // Predicated region
    $region10: #{deep_neural_network.1} parent=1 // pred_check
      _
    $region11: #{deep_neural_network.1} parent=1 // pred_check_branch
      %25 = sbr.rel (0) target = $region13
    $region12: #{deep_neural_network.1} parent=1 // pred_region
      %27 = dma.done [#allocation3], 1024
    $region13: #{deep_neural_network.1} parent=1 // pred_fallthru
      _
    %v28 = vld [vmem:[%s0] sm:$0xff]
    %v29 = vld [vmem:[%s0 + $0x8] sm:$0xff]
    %v30 = vld [vmem:[%s0 + $0x10] sm:$0x1]
    %v31 = vld [vmem:[#allocation2] sm:$0xff]
    %v32 = vld [vmem:[#allocation2 + $0x8] sm:$0x7f]
    %v33 = vld [vmem:[#allocation2 + $0x10] sm:$0xff]
    %v34 = vld [vmem:[#allocation2 + $0x18] sm:$0x7f]
    %v35 = vld [vmem:[#allocation2 + $0x20] sm:$0x7f]
    %v36 = vld [vmem:[#allocation2 + $0x28] sm:$0x7f]
    %v37 = vld [vmem:[#allocation2 + $0x30] sm:$0x7f]
    %v38 = vld [vmem:[#allocation2 + $0x38] sm:$0x1]
    %40 = vset.pattern.permute.xlu0 0
    %41 = vperm.xlu0 %40, %v33
    %v42 = vpop.permute.xlu0 %41
    %45 = vset.pattern.permute.xlu0 0
    %46 = vperm.xlu0 %45, %v34
    %v47 = vpop.permute.xlu0 %46
    %vm49 = vcmask 138240
    %v51 = vsel %vm49, %v31, 0
    %v54 = vsel %vm49, %v32, 0
    %vm56 = vcmask 1040384
    %v58 = vsel %vm56, %v30, 0
    %60 = vmatpush.msra.mxu0 0.0
    %61 = vmatpush.msra.mxu0 0.0
    %62 = vmatpush.msra.mxu0 0.0
    %63 = vmatpush.msra.mxu0 0.0
    %64 = vmatpush.msra.mxu0 0.0
    %65 = vmatpush.msra.mxu0 0.0
    %66 = vmatpush.msra.mxu0 0.0
    %67 = vmatpush.msra.mxu0 0.0
    %68 = vmatpush.msra.mxu0 0.0
    %69 = vmatpush.msra.mxu0 0.0
    %70 = vmatpush.msra.mxu0 0.0
    %71 = vmatpush.msra.mxu0 0.0
    %72 = vmatpush.msra.mxu0 0.0
    %73 = vmatpush.msra.mxu0 %v58
    %74 = vmatpush.msra.mxu0 %v29
    %75 = vmatpush.msra.mxu0 %v28
    %76 = vmatmul.f32.gmra.mxu0 %v51
    %v77 = vpop.f32.mrf.mxu0
    %v78 = vadd.f32 %v42, %v77
    %79 = vmatmul.f32.gmra.mxu0 %v54
    %v80 = vpop.f32.mrf.mxu0
    %v81 = vadd.f32 %v47, %v80
    %82 = vdwg.mxu0
    %v83 = vtanh.pop %v78
    %v84 = vtanh.pop %v81
    %86 = vset.pattern.permute.xlu0 0
    %87 = vperm.xlu0 %86, %v36
    %v88 = vpop.permute.xlu0 %87
    %vm90 = vcmask 121856
    %v92 = vsel %vm90, %v35, 0
    %vm94 = vcmask 1046528
    %v96 = vsel %vm94, %v84, 0
    %98 = vmatpush.msra.mxu0 0.0
    %99 = vmatpush.msra.mxu0 0.0
    %100 = vmatpush.msra.mxu0 0.0
    %101 = vmatpush.msra.mxu0 0.0
    %102 = vmatpush.msra.mxu0 0.0
    %103 = vmatpush.msra.mxu0 0.0
    %104 = vmatpush.msra.mxu0 0.0
    %105 = vmatpush.msra.mxu0 0.0
    %106 = vmatpush.msra.mxu0 0.0
    %107 = vmatpush.msra.mxu0 0.0
    %108 = vmatpush.msra.mxu0 0.0
    %109 = vmatpush.msra.mxu0 0.0
    %110 = vmatpush.msra.mxu0 0.0
    %111 = vmatpush.msra.mxu0 0.0
    %112 = vmatpush.msra.mxu0 %v96
    %113 = vmatpush.msra.mxu0 %v83
    %114 = vmatmul.f32.gmra.mxu0 %v92
    %v115 = vpop.f32.mrf.mxu0
    %v116 = vadd.f32 %v88, %v115
    %117 = vdwg.mxu0
    %v118 = vtanh.pop %v116
    %120 = vset.pattern.permute.xlu0 0
    %121 = vperm.xlu0 %120, %v37
    %v122 = vpop.permute.xlu0 %121
    %v124 = vmul.f32 %v118, %v122
    %v125 = vsel %vm94, %v124, 0.0
    %v126 = vrot.slane %v125, 4
    %v127 = vadd.f32 %v125, %v126
    %v128 = vrot.slane %v127, 2
    %v129 = vadd.f32 %v127, %v128
    %v130 = vrot.slane %v129, 1
    %v131 = vadd.f32 %v129, %v130
    %133 = vset.pattern.permute.xlu0 0
    %134 = vperm.xlu0 %133, %v38
    %v135 = vpop.permute.xlu0 %134
    %v137 = vadd.f32 %v131, %v135
    %138 = vst [vmem:[#allocation5] sm:$0x1] %v137
    // Predicated region
    $region14: #{deep_neural_network.1} parent=1 // pred_check
      _
    $region15: #{deep_neural_network.1} parent=1 // pred_check_branch
      %140 = sbr.rel (0) target = $region17
    $region16: #{deep_neural_network.1} parent=1 // pred_region
      %142 = vsyncadd [#allocation4], 0
      %s144 = sshll.u32 [#allocation5], 4
      %s145 = int_to_ptr.vmem [resolvable:$true] %s144
      %s146 = sshll.u32 %s2, 4
      %s147 = int_to_ptr.hbm [resolvable:$true] %s146
      %149 = dma.vmem_to_hbm [thread:$0]  %s145, 16, %s147, [#allocation4]
    $region17: #{deep_neural_network.1} parent=1 // pred_fallthru
      _
    // Predicated region
    $region18: #{deep_neural_network.1} parent=1 // pred_check
      _
    $region19: #{deep_neural_network.1} parent=1 // pred_check_branch
      %151 = sbr.rel (0) target = $region21
    $region20: #{deep_neural_network.1} parent=1 // pred_region
      %153 = dma.done [#allocation4], 16
    $region21: #{deep_neural_network.1} parent=1 // pred_fallthru
      _
    %154 = vsyncpa [#allocation3], 1
    %155 = vsyncpa [#allocation4], 1

</llo_original>
